<compile_context>
chip_gen: v7x
topology: tpu7x:2x2x1
jax: 0.10.0
libtpu: 0.0.40
codegen_flags: <defaults>
</compile_context>

<pallas_src>
import jax
import jax.numpy as jnp
from jax import lax
from jax.experimental import pallas as pl
from jax.experimental.pallas import tpu as pltpu


def _round_up(x, m):
    return ((x + m - 1) // m) * m


def _cdiv(a, b):
    return (a + b - 1) // b


# ----------------------------- kernels --------------------------------------


def _linear_bias_kernel(x_ref, w_ref, b_ref, o_ref, acc_ref):
    """Multi-K-step kernel: f32 VMEM accumulator, epilogue at the last k step."""
    @pl.when(pl.program_id(2) == 0)
    def _():
        acc_ref[...] = jnp.zeros_like(acc_ref)

    acc_ref[...] += lax.dot_general(
        x_ref[...], w_ref[...],
        dimension_numbers=(((1,), (1,)), ((), ())),   # contract K with K (N,K weight)
        preferred_element_type=jnp.float32)

    @pl.when(pl.program_id(2) == pl.num_programs(2) - 1)
    def _():
        o_ref[...] = (acc_ref[...] + b_ref[...]).astype(o_ref.dtype)


def _linear_nobias_kernel(x_ref, w_ref, o_ref, acc_ref):
    @pl.when(pl.program_id(2) == 0)
    def _():
        acc_ref[...] = jnp.zeros_like(acc_ref)

    acc_ref[...] += lax.dot_general(
        x_ref[...], w_ref[...],
        dimension_numbers=(((1,), (1,)), ((), ())),
        preferred_element_type=jnp.float32)

    @pl.when(pl.program_id(2) == pl.num_programs(2) - 1)
    def _():
        o_ref[...] = acc_ref[...].astype(o_ref.dtype)


def _linear_bias_single_k_kernel(x_ref, w_ref, b_ref, o_ref):
    """Single-K fast path: no scratch accumulator, no zero-init, no RMW."""
    acc = lax.dot_general(
        x_ref[...], w_ref[...],
        dimension_numbers=(((1,), (1,)), ((), ())),
        preferred_element_type=jnp.float32)
    o_ref[...] = (acc + b_ref[...]).astype(o_ref.dtype)


def _linear_nobias_single_k_kernel(x_ref, w_ref, o_ref):
    acc = lax.dot_general(
        x_ref[...], w_ref[...],
        dimension_numbers=(((1,), (1,)), ((), ())),
        preferred_element_type=jnp.float32)
    o_ref[...] = acc.astype(o_ref.dtype)


# --------------------------- tile selection ----------------------------------


def _tile_config(compute_dtype):
    """(tm, tn, tk, vmem_limit_bytes|None) per TPU generation.

    Targets chosen so tm*tn/(tm+tn) clears each generation's compute/BW ridge
    (bf16: v5e ~240, v6e ~650, v7x ~310 flops/byte) while accumulator +
    double-buffered tiles stay inside scoped VMEM.
    """
    kind = ""
    try:
        kind = jax.devices()[0].device_kind.lower()
    except Exception:
        pass
    bf16 = jnp.dtype(compute_dtype).itemsize < 4

    if "v5e" in kind or "v5 lite" in kind or "v5lite" in kind:
        # AI = 256 > ~240 ridge; ~4-7 MiB total -> fits 16 MiB scoped default.
        return 512, 512, 512, None
    if "v6" in kind:
        # AI ~683 > ~650 ridge; ~22-36 MiB -> raise the scoped VMEM limit
        # (v6e has 128 MiB physical VMEM).
        return 1024, 2048, (1024 if bf16 else 512), 80 * 1024 * 1024
    if "v7" in kind or "7x" in kind:
        # AI ~341 > ~310 ridge; ~10-14 MiB, safe on the 64 MiB part without
        # touching the 32 MiB scoped default.
        # (Possible further sweep: pl.Buffered(1) on out_spec / Buffered(3) on inputs.)
        return 512, 1024, (1024 if bf16 else 512), None
    # Unknown generation (v4 / v5p / ...): conservative tiles that fit a
    # 16 MiB scoped-VMEM default everywhere.
    return 512, 512, 512, None


def _fit_tile(dim, target, align):
    """Tile for a non-contracted dim: full extent if it fits, otherwise the
    smallest aligned tile covering `dim` in ceil(dim/target) blocks (avoids
    padding a ragged last block all the way up to a huge tile)."""
    if dim <= target:
        return dim
    nblocks = _cdiv(dim, target)
    return _round_up(_cdiv(dim, nblocks), align)


# ------------------------------ wrapper --------------------------------------


def linear_pallas(x, weight, bias=None, *, tm=None, tn=None, tk=None,
                  compute_dtype=None):
    """PyTorch Linear.forward: y = x @ weight.T (+ bias).

    weight: (out_features, in_features) — native PyTorch layout (no transpose).
    compute_dtype: opt-in lower-precision MXU path (e.g. jnp.bfloat16) for f32
    inputs; accumulation stays f32 and the output keeps x.dtype.
    """
    orig_shape = x.shape
    out_features, in_features = weight.shape
    x2d = x.reshape(-1, in_features)
    M, K, N = x2d.shape[0], in_features, out_features
    out_dtype = x.dtype

    # PyTorch semantics: weight.to(x.dtype); optional bf16 compute on top.
    w = weight if weight.dtype == x.dtype else weight.astype(x.dtype)
    if compute_dtype is not None and x2d.dtype != compute_dtype:
        x2d = x2d.astype(compute_dtype)
        w = w.astype(compute_dtype)
    cdt = x2d.dtype
    itemsize = jnp.dtype(cdt).itemsize

    tm_t, tn_t, tk_t, vmem_limit = _tile_config(cdt)
    if tm is not None:
        tm_t = tm
    if tn is not None:
        tn_t = tn
    if tk is not None:
        tk_t = tk

    align_m = max(8, 32 // itemsize)      # sublane packing: 8 f32, 16 bf16, 32 i8

    # Non-contracted dims: no padding. Ragged last blocks read undefined
    # out-of-bounds rows/cols, but those only feed output rows/cols that the
    # masked writeback drops, so valid output is unaffected.
    tm_b = _fit_tile(M, tm_t, align_m)
    tn_b = _fit_tile(N, tn_t, 128)

    # Contracted dim: blocks must exactly tile the (zero-padded) K extent so
    # no out-of-bounds garbage enters the accumulation.
    if K <= tk_t:
        tk_b, Kp = K, K                   # single-K fast path, no padding
    else:
        Kp = _round_up(K, 128)
        tk_b, t = 128, 128
        while t <= tk_t:
            if Kp % t == 0:
                tk_b = t
            t += 128
        if Kp != K:                       # only when K > tk target and K % 128 != 0
            x2d = jnp.pad(x2d, ((0, 0), (0, Kp - K)))
            w = jnp.pad(w, ((0, 0), (0, Kp - K)))

    gm, gn, gk = _cdiv(M, tm_b), _cdiv(N, tn_b), Kp // tk_b

    # Bias stays f32 and is added to the f32 accumulator before the single
    # downcast (avoids double rounding through bf16).
    has_bias = bias is not None
    operands = [x2d, w]
    if has_bias:
        operands.append(bias.astype(jnp.float32).reshape(1, N))

    # Truthful streaming estimate: x re-read per N tile, w per M tile.
    flops = 2 * M * N * Kp
    bytes_accessed = (M * Kp * itemsize * gn + N * Kp * itemsize * gm
                      + M * N * jnp.dtype(out_dtype).itemsize)
    if has_bias:
        bytes_accessed += N * 4 * gm

    if gk == 1:
        grid = (gm, gn)
        dims = ("parallel", "parallel")
        x_spec = pl.BlockSpec((tm_b, Kp), lambda i, j: (i, 0))
        w_spec = pl.BlockSpec((tn_b, Kp), lambda i, j: (j, 0))
        o_spec = pl.BlockSpec((tm_b, tn_b), lambda i, j: (i, j))
        b_spec = pl.BlockSpec((1, tn_b), lambda i, j: (0, j))
        scratch = []
        kernel = (_linear_bias_single_k_kernel if has_bias
                  else _linear_nobias_single_k_kernel)
    else:
        grid = (gm, gn, gk)
        dims = ("parallel", "parallel", "arbitrary")
        x_spec = pl.BlockSpec((tm_b, tk_b), lambda i, j, k: (i, k))
        w_spec = pl.BlockSpec((tn_b, tk_b), lambda i, j, k: (j, k))
        o_spec = pl.BlockSpec((tm_b, tn_b), lambda i, j, k: (i, j))
        b_spec = pl.BlockSpec((1, tn_b), lambda i, j, k: (0, j))
        scratch = [pltpu.VMEM((tm_b, tn_b), jnp.float32)]
        kernel = _linear_bias_kernel if has_bias else _linear_nobias_kernel

    in_specs = [x_spec, w_spec] + ([b_spec] if has_bias else [])

    cp_kwargs = dict(dimension_semantics=dims)
    if vmem_limit is not None:
        cp_kwargs["vmem_limit_bytes"] = vmem_limit

    out = pl.pallas_call(
        kernel,
        out_shape=jax.ShapeDtypeStruct((M, N), out_dtype),
        grid_spec=pltpu.PrefetchScalarGridSpec(
            num_scalar_prefetch=0,
            grid=grid,
            in_specs=in_specs,
            out_specs=o_spec,
            scratch_shapes=scratch),
        compiler_params=pltpu.CompilerParams(**cp_kwargs),
        cost_estimate=pl.CostEstimate(
            flops=int(flops), transcendentals=0,
            bytes_accessed=int(bytes_accessed)),
    )(*operands)

    return out.reshape(*orig_shape[:-1], out_features)


def init_linear_params(key, in_features, out_features, bias=True,
                       init_mode="kaiming_normal", init_weight=1.0,
                       init_bias=0.0):
    """Deterministic JAX re-implementation of weight_init() (kaiming_normal)."""
    kw, kb = jax.random.split(key)
    if init_mode == "kaiming_normal":
        w = jnp.sqrt(1.0 / in_features) * jax.random.normal(
            kw, (out_features, in_features), dtype=jnp.float32)
        b = jnp.sqrt(1.0 / in_features) * jax.random.normal(
            kb, (out_features,), dtype=jnp.float32)
    else:
        raise ValueError(f"unsupported init mode {init_mode}")
    w = w * init_weight
    b = (b * init_bias) if bias else None   # module default init_bias=0 -> zero bias
    return w, b


if __name__ == "__main__":
    key = jax.random.PRNGKey(0)
    k_x, k_p = jax.random.split(key)

    batch, seq, in_features, out_features = 2, 8, 32, 64
    x = jax.random.normal(k_x, (batch, seq, in_features), dtype=jnp.float32)
    weight, bias = init_linear_params(k_p, in_features, out_features, bias=True)

    # With bias (single-K fast path at these shapes).
    y = jax.block_until_ready(linear_pallas(x, weight, bias))
    y_ref = x @ weight.T + bias
    assert y.shape == (batch, seq, out_features)
    assert jnp.allclose(y, y_ref, atol=1e-5, rtol=1e-5)

    # Without bias (separate kernel — no zero-bias DMA).
    y_nb = jax.block_until_ready(linear_pallas(x, weight, None))
    assert jnp.allclose(y_nb, x @ weight.T, atol=1e-5, rtol=1e-5)

    # Opt-in bf16 compute path (f32 accumulation, f32 output).
    y_bf = jax.block_until_ready(
        linear_pallas(x, weight, bias, compute_dtype=jnp.bfloat16))
    assert y_bf.dtype == x.dtype
    assert jnp.allclose(y_bf, y_ref, atol=5e-2, rtol=5e-2)

    # Multi-K accumulator path + ragged M/N edge blocks + K padding, forced
    # via small explicit tile overrides (grid (2, 2, 2)).
    k1, k2, k3 = jax.random.split(jax.random.PRNGKey(1), 3)
    xr = jax.random.normal(k1, (10, 160), dtype=jnp.float32)
    wr = jax.random.normal(k2, (200, 160), dtype=jnp.float32) * 0.1
    br = jax.random.normal(k3, (200,), dtype=jnp.float32)
    yr = jax.block_until_ready(linear_pallas(xr, wr, br, tm=8, tn=128, tk=128))
    assert jnp.allclose(yr, xr @ wr.T + br, atol=1e-4, rtol=1e-4)

    print("KERNEL_OK")
</pallas_src>

<mosaic_0001>
module attributes {stable_mosaic.version = 11 : i64} {
  func.func @_linear_bias_single_k_kernel(%arg0: i32, %arg1: i32, %arg2: memref<16x32xf32, #tpu.memory_space<vmem>>, %arg3: memref<64x32xf32, #tpu.memory_space<vmem>>, %arg4: memref<1x64xf32, #tpu.memory_space<vmem>>, %arg5: memref<16x64xf32, #tpu.memory_space<vmem>>) attributes {dimension_semantics = [#tpu.dimension_semantics<parallel>, #tpu.dimension_semantics<parallel>], iteration_bounds = array<i64: 1, 1>, scalar_prefetch = 0 : i64, scratch_operands = 0 : i64, tpu.core_type = #tpu.core_type<tc>, window_params = [{transform_indices = @transform_0, window_bounds = array<i64: 16, 32>}, {transform_indices = @transform_1, window_bounds = array<i64: 64, 32>}, {transform_indices = @transform_2, window_bounds = array<i64: 1, 64>}, {transform_indices = @transform_3, window_bounds = array<i64: 16, 64>}]} {
    %c0 = arith.constant 0 : index
    %c0_0 = arith.constant 0 : index
    %0 = vector.load %arg2[%c0, %c0_0] : memref<16x32xf32, #tpu.memory_space<vmem>>, vector<16x32xf32>
    %c0_1 = arith.constant 0 : index
    %c0_2 = arith.constant 0 : index
    %1 = vector.load %arg3[%c0_1, %c0_2] : memref<64x32xf32, #tpu.memory_space<vmem>>, vector<64x32xf32>
    %cst = arith.constant dense<0.000000e+00> : vector<16x64xf32>
    %2 = tpu.matmul %0, %1, %cst {dimension_numbers = #tpu.dot_dimension_numbers<[1], [1], [0], [0], [0, 0, 1, 0], [], []>} : vector<16x32xf32>, vector<64x32xf32>, vector<16x64xf32> -> vector<16x64xf32>
    %c0_3 = arith.constant 0 : index
    %c0_4 = arith.constant 0 : index
    %3 = vector.load %arg4[%c0_3, %c0_4] : memref<1x64xf32, #tpu.memory_space<vmem>>, vector<1x64xf32>
    %4 = vector.broadcast %3 : vector<1x64xf32> to vector<16x64xf32>
    %5 = arith.addf %2, %4 : vector<16x64xf32>
    %c0_5 = arith.constant 0 : index
    %c0_6 = arith.constant 0 : index
    %6 = vector.load %arg5[%c0_5, %c0_6] : memref<16x64xf32, #tpu.memory_space<vmem>>, vector<16x64xf32>
    tpu.vector_store %arg5[%c0_5, %c0_6], %5 {strides = array<i32>} : memref<16x64xf32, #tpu.memory_space<vmem>>, vector<16x64xf32>,
    return
  }
  func.func @transform_0(%arg0: i32, %arg1: i32) -> (i32, i32) {
    %c0_i32 = arith.constant 0 : i32
    %c0_i32_0 = arith.constant 0 : i32
    return %arg0, %c0_i32 : i32, i32
  }
  func.func @transform_1(%arg0: i32, %arg1: i32) -> (i32, i32) {
    %c0_i32 = arith.constant 0 : i32
    %c0_i32_0 = arith.constant 0 : i32
    return %arg1, %c0_i32 : i32, i32
  }
  func.func @transform_2(%arg0: i32, %arg1: i32) -> (i32, i32) {
    %c0_i32 = arith.constant 0 : i32
    %c0_i32_0 = arith.constant 0 : i32
    return %c0_i32, %arg1 : i32, i32
  }
  func.func @transform_3(%arg0: i32, %arg1: i32) -> (i32, i32) {
    %c0_i32 = arith.constant 0 : i32
    return %arg0, %arg1 : i32, i32
  }
}

</mosaic_0001>

<llo_original>
// kernel: tpu_custom_call.1
$region0: #{tpu_custom_call.1}
  #allocation0 [shape = 'u32[]', space=smem, size = 0x4, offset = 0x4, fixed_abs, tag = 'smem constant byte address 0x4 - core index']
  #allocation1 [shape = 'u32[144,128]{1,0:T(1,128)}', space=vmem, size = 0x12000, scoped, tag = 'internal scratch']
  %s0 = inlined_call_operand.vmem [shape: f32[16,32], index: 0, kind: input, shape index: {}]
  %s1 = inlined_call_operand.vmem [shape: f32[64,32], index: 1, kind: input, shape index: {}]
  %s2 = inlined_call_operand.vmem [shape: f32[1,64], index: 2, kind: input, shape index: {}]
  %s3 = inlined_call_operand.hbm [shape: f32[16,64], index: 3, kind: output, shape index: {}]
  %s4 = sld [smem:[#allocation0]]
  $region22: #{tpu_custom_call.1} parent=0
    _
  %s6 = ssub.s32 1, %s4
  %s7 = scalar_select 0, %s6, %s4
  $region1: #{tpu_custom_call.1} parent=0
    #allocation2 [shape = 'u8[8192]{0}', space=vmem, size = 0x2000, scoped, tag = 'output window, operand 0, single buffered']
    #allocation3 [shape = 's32[1]{0}', space=sflag, size = 0x4, scoped, tag = 'scoped memory for tpu_custom_call.1']
    %8 = vsyncpa [#allocation3], 0
    // Predicated region
    $region2: #{tpu_custom_call.1} parent=1 // pred_check
      _
    $region3: #{tpu_custom_call.1} parent=1 // pred_check_branch
      %10 = sbr.rel (0) target = $region5
    $region4: #{tpu_custom_call.1} parent=1 // pred_region
      _
    $region5: #{tpu_custom_call.1} parent=1 // pred_fallthru
      _
    // Predicated region
    $region6: #{tpu_custom_call.1} parent=1 // pred_check
      _
    $region7: #{tpu_custom_call.1} parent=1 // pred_check_branch
      %12 = sbr.rel (0) target = $region9
    $region8: #{tpu_custom_call.1} parent=1 // pred_region
      _
    $region9: #{tpu_custom_call.1} parent=1 // pred_fallthru
      _
    // Predicated region
    $region10: #{tpu_custom_call.1} parent=1 // pred_check
      _
    $region11: #{tpu_custom_call.1} parent=1 // pred_check_branch
      %14 = sbr.rel (0) target = $region13
    $region12: #{tpu_custom_call.1} parent=1 // pred_region
      _
    $region13: #{tpu_custom_call.1} parent=1 // pred_fallthru
      _
    %v15 = vld [vmem:[%s0] sm:$0xff]
    %v16 = vld [vmem:[%s0 + $0x8] sm:$0xff]
    %v17 = vld [vmem:[%s1] sm:$0xff]
    %v18 = vld [vmem:[%s1 + $0x8] sm:$0xff]
    %v19 = vld [vmem:[%s1 + $0x10] sm:$0xff]
    %v20 = vld [vmem:[%s1 + $0x18] sm:$0xff]
    %v21 = vld [vmem:[%s1 + $0x20] sm:$0xff]
    %v22 = vld [vmem:[%s1 + $0x28] sm:$0xff]
    %v23 = vld [vmem:[%s1 + $0x30] sm:$0xff]
    %v24 = vld [vmem:[%s1 + $0x38] sm:$0xff]
    %v25 = vld [vmem:[%s2] sm:$0x1]
    %v27 = vlaneseq
    %v28 = vshrl.u32 %v27, 7
    %v29 = vsub.s32 0, %v28
    %v30 = vrot.slane %v25, %v29
    %vm32 = vcmask 261120
    %v34 = vsel %vm32, %v15, 0
    %v37 = vsel %vm32, %v16, 0
    %v40 = vsel %vm32, %v17, 0
    %v43 = vsel %vm32, %v18, 0
    %v46 = vsel %vm32, %v19, 0
    %v49 = vsel %vm32, %v20, 0
    %v52 = vsel %vm32, %v21, 0
    %v55 = vsel %vm32, %v22, 0
    %v58 = vsel %vm32, %v23, 0
    %v61 = vsel %vm32, %v24, 0
    %63 = vmatprep.subr.mxu0 0.0
    %64 = vmatpush1.xpose.msra.mxu0 %v40
    %65 = vmatprep.subr.mxu0 0.0
    %66 = vmatpush1.xpose.msra.mxu0 %v43
    %67 = vmatprep.subr.mxu0 0.0
    %68 = vmatpush1.xpose.msra.mxu0 %v46
    %69 = vmatprep.subr.mxu0 0.0
    %70 = vmatpush1.xpose.msra.mxu0 %v49
    %71 = vmatprep.subr.mxu0 0.0
    %72 = vmatpush1.xpose.msra.mxu0 %v52
    %73 = vmatprep.subr.mxu0 0.0
    %74 = vmatpush1.xpose.msra.mxu0 %v55
    %75 = vmatprep.subr.mxu0 0.0
    %76 = vmatpush1.xpose.msra.mxu0 %v58
    %77 = vmatprep.subr.mxu0 0.0
    %78 = vmatpush1.xpose.msra.mxu0 %v61
    %79 = vmatprep.subr.mxu0 0.0
    %80 = vmatpush1.xpose.msra.mxu0 0.0
    %81 = vmatprep.subr.mxu0 0.0
    %82 = vmatpush1.xpose.msra.mxu0 0.0
    %83 = vmatprep.subr.mxu0 0.0
    %84 = vmatpush1.xpose.msra.mxu0 0.0
    %85 = vmatprep.subr.mxu0 0.0
    %86 = vmatpush1.xpose.msra.mxu0 0.0
    %87 = vmatprep.subr.mxu0 0.0
    %88 = vmatpush1.xpose.msra.mxu0 0.0
    %89 = vmatprep.subr.mxu0 0.0
    %90 = vmatpush1.xpose.msra.mxu0 0.0
    %91 = vmatprep.subr.mxu0 0.0
    %92 = vmatpush1.xpose.msra.mxu0 0.0
    %93 = vmatprep.subr.mxu0 0.0
    %94 = vmatpush1.xpose.msra.mxu0 0.0
    %95 = vmatprep.subr.mxu0 0.0
    %96 = vmatpush1.xpose.msra.mxu0 0.0
    %97 = vmatprep.subr.mxu0 0.0
    %98 = vmatpush1.xpose.msra.mxu0 0.0
    %99 = vmatprep.subr.mxu0 0.0
    %100 = vmatpush1.xpose.msra.mxu0 0.0
    %101 = vmatprep.subr.mxu0 0.0
    %102 = vmatpush1.xpose.msra.mxu0 0.0
    %103 = vmatprep.subr.mxu0 0.0
    %104 = vmatpush1.xpose.msra.mxu0 0.0
    %105 = vmatprep.subr.mxu0 0.0
    %106 = vmatpush1.xpose.msra.mxu0 0.0
    %107 = vmatprep.subr.mxu0 0.0
    %108 = vmatpush1.xpose.msra.mxu0 0.0
    %109 = vmatprep.subr.mxu0 0.0
    %110 = vmatpush1.xpose.msra.mxu0 0.0
    %111 = vmatprep.subr.mxu0 0.0
    %112 = vmatpush1.xpose.msra.mxu0 0.0
    %113 = vmatprep.subr.mxu0 0.0
    %114 = vmatpush1.xpose.msra.mxu0 0.0
    %115 = vmatprep.subr.mxu0 0.0
    %116 = vmatpush1.xpose.msra.mxu0 0.0
    %117 = vmatprep.subr.mxu0 0.0
    %118 = vmatpush1.xpose.msra.mxu0 0.0
    %119 = vmatprep.subr.mxu0 0.0
    %120 = vmatpush1.xpose.msra.mxu0 0.0
    %121 = vmatprep.subr.mxu0 0.0
    %122 = vmatpush1.xpose.msra.mxu0 0.0
    %123 = vmatprep.subr.mxu0 0.0
    %124 = vmatpush1.xpose.msra.mxu0 0.0
    %125 = vmatprep.subr.mxu0 0.0
    %126 = vmatpush1.xpose.msra.mxu0 0.0
    %127 = vmatprep.mubr.f32.mxu0 0.0
    %128 = vmatmul.mubr.f32.gmra.mrb[0].mxu0 %v34
    %v129 = vpop.f32.mrb[0].mxu0
    %v130 = vadd.f32 %v30, %v129
    %v131 = vpop.f32.mrb[0].mxu0
    %132 = vmatprep.mubr.f32.mxu0 0.0
    %133 = vmatmul.mubr.f32.gmra.mrb[0].mxu0 %v37
    %v134 = vpop.f32.mrb[0].mxu0
    %v135 = vadd.f32 %v30, %v134
    %v136 = vpop.f32.mrb[0].mxu0
    %137 = vdwg.mxu0
    %vm138 = vcmask 523264
    %139 = vst.msk [vmem:[#allocation2] sm:$0xff] %vm138, %v130
    %140 = vst.msk [vmem:[#allocation2 + $0x8] sm:$0xff] %vm138, %v135
    // Predicated region
    $region14: #{tpu_custom_call.1} parent=1 // pred_check
      _
    $region15: #{tpu_custom_call.1} parent=1 // pred_check_branch
      %142 = sbr.rel (0) target = $region17
    $region16: #{tpu_custom_call.1} parent=1 // pred_region
      %s144 = ssub.s32 256, 256
      %145 = vsyncadd [#allocation3], %s144
      %s146 = sshll.u32 [#allocation2], 4
      %s147 = int_to_ptr.vmem [resolvable:$true] %s146
      %152 = dma.vmem_to_hbm [thread:$0]  %s147, 256, %s3, [#allocation3], 128, 128, 8
    $region17: #{tpu_custom_call.1} parent=1 // pred_fallthru
      _
    // Predicated region
    $region18: #{tpu_custom_call.1} parent=1 // pred_check
      _
    $region19: #{tpu_custom_call.1} parent=1 // pred_check_branch
      %154 = sbr.rel (0) target = $region21
    $region20: #{tpu_custom_call.1} parent=1 // pred_region
      %155 = dma.done [#allocation3], 256
    $region21: #{tpu_custom_call.1} parent=1 // pred_fallthru
      _
    %156 = vsyncpa [#allocation3], 1

</llo_original>
